<compile_context>
chip_gen: v5e
topology: v5e:2x2
jax: 0.10.0
libtpu: 0.0.40
codegen_flags: <defaults>
</compile_context>

<pallas_src>
import jax
import jax.numpy as jnp
from jax.experimental import pallas as pl
from jax.experimental.pallas import tpu as pltpu


def mlp_kernel(x_ref,
               w1_ref, b1_ref,
               w2_ref, b2_ref,
               w3_ref, b3_ref,
               w4_ref, b4_ref,
               o_ref):
    # x arrives f32; fold the f32->bf16 cast into the kernel (saves one XLA pass).
    x = x_ref[...].astype(w1_ref.dtype)
    # fc1 + relu (bf16 on the MXU, f32 accumulate, f32 bias/ReLU)
    h = jnp.dot(x, w1_ref[...], preferred_element_type=jnp.float32)
    h = jnp.maximum(h + b1_ref[...], 0.0)
    # fc2 + relu
    h = jnp.dot(h.astype(w2_ref.dtype), w2_ref[...],
                preferred_element_type=jnp.float32)
    h = jnp.maximum(h + b2_ref[...], 0.0)
    # fc3 + relu
    h = jnp.dot(h.astype(w3_ref.dtype), w3_ref[...],
                preferred_element_type=jnp.float32)
    h = jnp.maximum(h + b3_ref[...], 0.0)
    # fc4 (narrow 3-class head, no activation)
    h = jnp.dot(h.astype(w4_ref.dtype), w4_ref[...],
                preferred_element_type=jnp.float32)
    o_ref[...] = (h + b4_ref[...]).astype(o_ref.dtype)


def prepare_params(params, compute_dtype=jnp.bfloat16):
    """One-time parameter prep (hoisted out of the forward hot path):
    weights -> bf16 [in, out], biases -> f32 [1, out]."""
    prepared = []
    for name in ("fc1", "fc2", "fc3", "fc4"):
        w, b = params[name]
        prepared.append(jnp.asarray(w, compute_dtype))
        prepared.append(jnp.asarray(b, jnp.float32).reshape(1, -1))
    return tuple(prepared)


def _choose_tile_b(B):
    """Batch-aware tile: >=4 grid steps (2 per v7x TC) when B allows, rounded
    to 8 sublanes, capped at 512 rows for large B."""
    if B <= 32:
        return B  # single full-batch tile (block dim == full dim is legal)
    tile = min(512, max(8, B // 4))
    return max(8, (tile // 8) * 8)


def zone_prediction_forward(x, prepared, *, tile_b=None):
    """x: [B, input_dim] float32; prepared: output of prepare_params()."""
    w1, b1, w2, b2, w3, b3, w4, b4 = prepared
    B, D = x.shape
    out_dim = w4.shape[1]

    if tile_b is None:
        tile_b = _choose_tile_b(B)
    tile_b = min(tile_b, B)

    # Ragged tail: pad the batch to a tile multiple; slice back at the end
    # (inside the same jit as the caller so it fuses with the consumer).
    n_tiles = pl.cdiv(B, tile_b)
    b_pad = n_tiles * tile_b
    x_in = jnp.pad(x, ((0, b_pad - B), (0, 0))) if b_pad != B else x

    # Grid-invariant weights/biases: same block every step -> single buffer.
    def resident_spec(shape):
        nblock = len(shape)
        return pl.BlockSpec(shape, lambda i: (0,) * nblock,
                            pipeline_mode=pl.Buffered(1))

    # VMEM budget: real footprint is ~2 MiB; no artificial floor, cap well
    # below v7x's 64 MiB physical VMEM.
    w_bytes = sum(int(a.size) * a.dtype.itemsize
                  for a in (w1, b1, w2, b2, w3, b3, w4, b4))
    budget = (2 * tile_b * D * 4          # double-buffered f32 x tile
              + 2 * tile_b * 128 * 4      # double-buffered output tile (lane-padded in VMEM)
              + w_bytes + (1 << 20)       # resident weights + tile-padding slack
              + 4 * tile_b * 256 * 4      # activation headroom (widest layer = 256)
              + (4 << 20))                # Mosaic internal scratch slack
    vmem_limit = int(min(budget, 48 << 20))

    out = pl.pallas_call(
        mlp_kernel,
        out_shape=jax.ShapeDtypeStruct((b_pad, out_dim), jnp.float32),
        grid_spec=pltpu.PrefetchScalarGridSpec(
            num_scalar_prefetch=0,
            grid=(n_tiles,),
            in_specs=[
                pl.BlockSpec((tile_b, D), lambda i: (i, 0)),   # x batch tile (f32)
                resident_spec(w1.shape), resident_spec(b1.shape),
                resident_spec(w2.shape), resident_spec(b2.shape),
                resident_spec(w3.shape), resident_spec(b3.shape),
                resident_spec(w4.shape), resident_spec(b4.shape),
            ],
            out_specs=pl.BlockSpec((tile_b, out_dim), lambda i: (i, 0)),
        ),
        compiler_params=pltpu.CompilerParams(
            dimension_semantics=("parallel",),
            vmem_limit_bytes=vmem_limit),
    )(x_in, w1, b1, w2, b2, w3, b3, w4, b4)

    return out[:B] if b_pad != B else out


def init_params(key, input_dim):
    """nn.Linear-style init: U(-1/sqrt(fan_in), 1/sqrt(fan_in)); w stored [in, out]."""
    dims = [(input_dim, 128), (128, 256), (256, 128), (128, 3)]
    names = ["fc1", "fc2", "fc3", "fc4"]
    params = {}
    for name, (fan_in, fan_out) in zip(names, dims):
        key, kw, kb = jax.random.split(key, 3)
        bound = 1.0 / float(jnp.sqrt(fan_in))
        w = jax.random.uniform(kw, (fan_in, fan_out), jnp.float32, -bound, bound)
        b = jax.random.uniform(kb, (1, fan_out), jnp.float32, -bound, bound)
        params[name] = (w, b)
    return params


def reference_forward(x, params, compute_dtype=jnp.bfloat16):
    """Pure-JAX reference mirroring the kernel's bf16-matmul / f32-accumulate math."""
    h = x.astype(compute_dtype)
    for name in ("fc1", "fc2", "fc3"):
        w, b = params[name]
        h = jnp.dot(h, w.astype(compute_dtype), preferred_element_type=jnp.float32)
        h = jnp.maximum(h + b.astype(jnp.float32), 0.0)
        h = h.astype(compute_dtype)
    w, b = params["fc4"]
    h = jnp.dot(h, w.astype(compute_dtype), preferred_element_type=jnp.float32)
    return h + b.astype(jnp.float32)


if __name__ == "__main__":
    key = jax.random.PRNGKey(0)
    key, kx = jax.random.split(key)

    # 512 rows, D=32: tile_b -> 128, grid=(4,) so both v7x TCs get 2 pipelined steps.
    B, input_dim = 512, 32
    x = jax.random.normal(kx, (B, input_dim), jnp.float32)
    params = init_params(key, input_dim)

    prepared = prepare_params(params)        # one-time bf16/f32 prep (not in hot path)
    fwd = jax.jit(zone_prediction_forward)

    out = jax.block_until_ready(fwd(x, prepared))
    assert out.shape == (B, 3)
    ref = reference_forward(x, params)
    # bf16 MXU inputs -> loosened tolerance vs a pure-f32 check (intentional).
    assert jnp.allclose(out, ref, atol=2e-2, rtol=2e-2), "mismatch vs reference"

    # Ragged-batch path: B not a multiple of the chosen tile -> pad + slice.
    key, kx2 = jax.random.split(key)
    B2 = 100
    x2 = jax.random.normal(kx2, (B2, input_dim), jnp.float32)
    out2 = jax.block_until_ready(fwd(x2, prepared))
    assert out2.shape == (B2, 3)
    ref2 = reference_forward(x2, params)
    assert jnp.allclose(out2, ref2, atol=2e-2, rtol=2e-2), "mismatch vs reference (ragged)"

    print("KERNEL_OK")
</pallas_src>

<mosaic_0001>
module attributes {stable_mosaic.version = 11 : i64} {
  func.func @mlp_kernel(%arg0: i32, %arg1: memref<128x32xf32, #tpu.memory_space<vmem>>, %arg2: memref<32x128xbf16, #tpu.memory_space<vmem>>, %arg3: memref<1x128xf32, #tpu.memory_space<vmem>>, %arg4: memref<128x256xbf16, #tpu.memory_space<vmem>>, %arg5: memref<1x256xf32, #tpu.memory_space<vmem>>, %arg6: memref<256x128xbf16, #tpu.memory_space<vmem>>, %arg7: memref<1x128xf32, #tpu.memory_space<vmem>>, %arg8: memref<128x3xbf16, #tpu.memory_space<vmem>>, %arg9: memref<1x3xf32, #tpu.memory_space<vmem>>, %arg10: memref<128x3xf32, #tpu.memory_space<vmem>>) attributes {dimension_semantics = [#tpu.dimension_semantics<parallel>], iteration_bounds = array<i64: 4>, scalar_prefetch = 0 : i64, scratch_operands = 0 : i64, tpu.core_type = #tpu.core_type<tc>, window_params = [{transform_indices = @transform_0, window_bounds = array<i64: 128, 32>}, {pipeline_mode = #tpu.pipeline_mode<synchronous>, transform_indices = @transform_1, window_bounds = array<i64: 32, 128>}, {pipeline_mode = #tpu.pipeline_mode<synchronous>, transform_indices = @transform_2, window_bounds = array<i64: 1, 128>}, {pipeline_mode = #tpu.pipeline_mode<synchronous>, transform_indices = @transform_3, window_bounds = array<i64: 128, 256>}, {pipeline_mode = #tpu.pipeline_mode<synchronous>, transform_indices = @transform_4, window_bounds = array<i64: 1, 256>}, {pipeline_mode = #tpu.pipeline_mode<synchronous>, transform_indices = @transform_5, window_bounds = array<i64: 256, 128>}, {pipeline_mode = #tpu.pipeline_mode<synchronous>, transform_indices = @transform_6, window_bounds = array<i64: 1, 128>}, {pipeline_mode = #tpu.pipeline_mode<synchronous>, transform_indices = @transform_7, window_bounds = array<i64: 128, 3>}, {pipeline_mode = #tpu.pipeline_mode<synchronous>, transform_indices = @transform_8, window_bounds = array<i64: 1, 3>}, {transform_indices = @transform_9, window_bounds = array<i64: 128, 3>}]} {
    %c0 = arith.constant 0 : index
    %c0_0 = arith.constant 0 : index
    %0 = vector.load %arg1[%c0, %c0_0] : memref<128x32xf32, #tpu.memory_space<vmem>>, vector<128x32xf32>
    %1 = arith.truncf %0 : vector<128x32xf32> to vector<128x32xbf16>
    %c0_1 = arith.constant 0 : index
    %c0_2 = arith.constant 0 : index
    %2 = vector.load %arg2[%c0_1, %c0_2] : memref<32x128xbf16, #tpu.memory_space<vmem>>, vector<32x128xbf16>
    %cst = arith.constant dense<0.000000e+00> : vector<128x128xf32>
    %3 = tpu.matmul %1, %2, %cst {dimension_numbers = #tpu.dot_dimension_numbers<[1], [0], [0], [1], [0, 0, 1, 1], [], []>} : vector<128x32xbf16>, vector<32x128xbf16>, vector<128x128xf32> -> vector<128x128xf32>
    %c0_3 = arith.constant 0 : index
    %c0_4 = arith.constant 0 : index
    %4 = vector.load %arg3[%c0_3, %c0_4] : memref<1x128xf32, #tpu.memory_space<vmem>>, vector<1x128xf32>
    %5 = vector.broadcast %4 : vector<1x128xf32> to vector<128x128xf32>
    %6 = arith.addf %3, %5 : vector<128x128xf32>
    %cst_5 = arith.constant 0.000000e+00 : f32
    %7 = vector.broadcast %cst_5 : f32 to vector<128x128xf32>
    %8 = arith.maximumf %6, %7 : vector<128x128xf32>
    %9 = arith.truncf %8 : vector<128x128xf32> to vector<128x128xbf16>
    %c0_6 = arith.constant 0 : index
    %c0_7 = arith.constant 0 : index
    %10 = vector.load %arg4[%c0_6, %c0_7] : memref<128x256xbf16, #tpu.memory_space<vmem>>, vector<128x256xbf16>
    %cst_8 = arith.constant dense<0.000000e+00> : vector<128x256xf32>
    %11 = tpu.matmul %9, %10, %cst_8 {dimension_numbers = #tpu.dot_dimension_numbers<[1], [0], [0], [1], [0, 0, 1, 1], [], []>} : vector<128x128xbf16>, vector<128x256xbf16>, vector<128x256xf32> -> vector<128x256xf32>
    %c0_9 = arith.constant 0 : index
    %c0_10 = arith.constant 0 : index
    %12 = vector.load %arg5[%c0_9, %c0_10] : memref<1x256xf32, #tpu.memory_space<vmem>>, vector<1x256xf32>
    %13 = vector.broadcast %12 : vector<1x256xf32> to vector<128x256xf32>
    %14 = arith.addf %11, %13 : vector<128x256xf32>
    %cst_11 = arith.constant 0.000000e+00 : f32
    %15 = vector.broadcast %cst_11 : f32 to vector<128x256xf32>
    %16 = arith.maximumf %14, %15 : vector<128x256xf32>
    %17 = arith.truncf %16 : vector<128x256xf32> to vector<128x256xbf16>
    %c0_12 = arith.constant 0 : index
    %c0_13 = arith.constant 0 : index
    %18 = vector.load %arg6[%c0_12, %c0_13] : memref<256x128xbf16, #tpu.memory_space<vmem>>, vector<256x128xbf16>
    %cst_14 = arith.constant dense<0.000000e+00> : vector<128x128xf32>
    %19 = tpu.matmul %17, %18, %cst_14 {dimension_numbers = #tpu.dot_dimension_numbers<[1], [0], [0], [1], [0, 0, 1, 1], [], []>} : vector<128x256xbf16>, vector<256x128xbf16>, vector<128x128xf32> -> vector<128x128xf32>
    %c0_15 = arith.constant 0 : index
    %c0_16 = arith.constant 0 : index
    %20 = vector.load %arg7[%c0_15, %c0_16] : memref<1x128xf32, #tpu.memory_space<vmem>>, vector<1x128xf32>
    %21 = vector.broadcast %20 : vector<1x128xf32> to vector<128x128xf32>
    %22 = arith.addf %19, %21 : vector<128x128xf32>
    %cst_17 = arith.constant 0.000000e+00 : f32
    %23 = vector.broadcast %cst_17 : f32 to vector<128x128xf32>
    %24 = arith.maximumf %22, %23 : vector<128x128xf32>
    %25 = arith.truncf %24 : vector<128x128xf32> to vector<128x128xbf16>
    %c0_18 = arith.constant 0 : index
    %c0_19 = arith.constant 0 : index
    %26 = vector.load %arg8[%c0_18, %c0_19] : memref<128x3xbf16, #tpu.memory_space<vmem>>, vector<128x3xbf16>
    %cst_20 = arith.constant dense<0.000000e+00> : vector<128x3xf32>
    %27 = tpu.matmul %25, %26, %cst_20 {dimension_numbers = #tpu.dot_dimension_numbers<[1], [0], [0], [1], [0, 0, 1, 1], [], []>} : vector<128x128xbf16>, vector<128x3xbf16>, vector<128x3xf32> -> vector<128x3xf32>
    %c0_21 = arith.constant 0 : index
    %c0_22 = arith.constant 0 : index
    %28 = vector.load %arg9[%c0_21, %c0_22] : memref<1x3xf32, #tpu.memory_space<vmem>>, vector<1x3xf32>
    %29 = vector.broadcast %28 : vector<1x3xf32> to vector<128x3xf32>
    %30 = arith.addf %27, %29 : vector<128x3xf32>
    %c0_23 = arith.constant 0 : index
    %c0_24 = arith.constant 0 : index
    %31 = vector.load %arg10[%c0_23, %c0_24] : memref<128x3xf32, #tpu.memory_space<vmem>>, vector<128x3xf32>
    tpu.vector_store %arg10[%c0_23, %c0_24], %30 {strides = array<i32>} : memref<128x3xf32, #tpu.memory_space<vmem>>, vector<128x3xf32>,
    return
  }
  func.func @transform_0(%arg0: i32) -> (i32, i32) {
    %c0_i32 = arith.constant 0 : i32
    %c0_i32_0 = arith.constant 0 : i32
    return %arg0, %c0_i32 : i32, i32
  }
  func.func @transform_1(%arg0: i32) -> (i32, i32) {
    %c0_i32 = arith.constant 0 : i32
    %c0_i32_0 = arith.constant 0 : i32
    %c0_i32_1 = arith.constant 0 : i32
    return %c0_i32, %c0_i32_0 : i32, i32
  }
  func.func @transform_2(%arg0: i32) -> (i32, i32) {
    %c0_i32 = arith.constant 0 : i32
    %c0_i32_0 = arith.constant 0 : i32
    %c0_i32_1 = arith.constant 0 : i32
    return %c0_i32, %c0_i32_0 : i32, i32
  }
  func.func @transform_3(%arg0: i32) -> (i32, i32) {
    %c0_i32 = arith.constant 0 : i32
    %c0_i32_0 = arith.constant 0 : i32
    %c0_i32_1 = arith.constant 0 : i32
    return %c0_i32, %c0_i32_0 : i32, i32
  }
  func.func @transform_4(%arg0: i32) -> (i32, i32) {
    %c0_i32 = arith.constant 0 : i32
    %c0_i32_0 = arith.constant 0 : i32
    %c0_i32_1 = arith.constant 0 : i32
    return %c0_i32, %c0_i32_0 : i32, i32
  }
  func.func @transform_5(%arg0: i32) -> (i32, i32) {
    %c0_i32 = arith.constant 0 : i32
    %c0_i32_0 = arith.constant 0 : i32
    %c0_i32_1 = arith.constant 0 : i32
    return %c0_i32, %c0_i32_0 : i32, i32
  }
  func.func @transform_6(%arg0: i32) -> (i32, i32) {
    %c0_i32 = arith.constant 0 : i32
    %c0_i32_0 = arith.constant 0 : i32
    %c0_i32_1 = arith.constant 0 : i32
    return %c0_i32, %c0_i32_0 : i32, i32
  }
  func.func @transform_7(%arg0: i32) -> (i32, i32) {
    %c0_i32 = arith.constant 0 : i32
    %c0_i32_0 = arith.constant 0 : i32
    %c0_i32_1 = arith.constant 0 : i32
    return %c0_i32, %c0_i32_0 : i32, i32
  }
  func.func @transform_8(%arg0: i32) -> (i32, i32) {
    %c0_i32 = arith.constant 0 : i32
    %c0_i32_0 = arith.constant 0 : i32
    %c0_i32_1 = arith.constant 0 : i32
    return %c0_i32, %c0_i32_0 : i32, i32
  }
  func.func @transform_9(%arg0: i32) -> (i32, i32) {
    %c0_i32 = arith.constant 0 : i32
    %c0_i32_0 = arith.constant 0 : i32
    return %arg0, %c0_i32 : i32, i32
  }
}

</mosaic_0001>

<llo_original>
// kernel: zone_prediction_forward.1
$region0: #{zone_prediction_forward.1}
  #allocation0 [shape = 'u32[]', space=smem, size = 0x4, offset = 0x4, fixed_abs, tag = 'smem constant byte address 0x4 - core index']
  #allocation1 [shape = 'u32[72,128]{1,0:T(1,128)}', space=vmem, size = 0x9000, scoped, tag = 'internal scratch']
  %s0 = inlined_call_operand.vmem [shape: f32[512,32], index: 0, kind: input, shape index: {}]
  %s1 = inlined_call_operand.vmem [shape: bf16[32,128], index: 1, kind: input, shape index: {}]
  %s2 = inlined_call_operand.vmem [shape: f32[1,128], index: 2, kind: input, shape index: {}]
  %s3 = inlined_call_operand.vmem [shape: bf16[128,256], index: 3, kind: input, shape index: {}]
  %s4 = inlined_call_operand.vmem [shape: f32[1,256], index: 4, kind: input, shape index: {}]
  %s5 = inlined_call_operand.vmem [shape: bf16[256,128], index: 5, kind: input, shape index: {}]
  %s6 = inlined_call_operand.vmem [shape: f32[1,128], index: 6, kind: input, shape index: {}]
  %s7 = inlined_call_operand.vmem [shape: bf16[128,3], index: 7, kind: input, shape index: {}]
  %s8 = inlined_call_operand.vmem [shape: f32[1,3], index: 8, kind: input, shape index: {}]
  %s9 = inlined_call_operand.vmem [shape: f32[512,3], index: 9, kind: output, shape index: {}]
  %s10 = sld [smem:[#allocation0]]
  $region69: #{zone_prediction_forward.1} parent=0
    _
  %s12 = ssub.s32 1, %s10
  %s13 = scalar_select 0, %s12, %s10
  loop: start=0, step=1, limit=6
  $region2: #{zone_prediction_forward.1} parent=0 // loop_pre_header
    _
  $region3: #{zone_prediction_forward.1} parent=0 // loop_header
    %s15 = sphi 0, %s19
    %p16 = scmp.ge.s32.totalorder %s15, 6
    %s25 = sphi 0, %s27
    %s28 = sphi 0, %s25
    %s29 = sphi 0, %s28
    %s45 = sphi 0, %s29
    %s49 = sphi 0, %s49
    %s51 = sphi 0, %s49
    %s52 = sphi 0, %s51
    %s66 = sphi 0, %s52
    %s70 = sphi 0, %s70
    %s72 = sphi 0, %s70
    %s73 = sphi 0, %s72
    %s87 = sphi 0, %s73
    %s91 = sphi 0, %s91
    %s93 = sphi 0, %s91
    %s94 = sphi 0, %s93
    %s108 = sphi 0, %s94
    %s112 = sphi 0, %s112
    %s114 = sphi 0, %s112
    %s115 = sphi 0, %s114
    %s129 = sphi 0, %s115
    %s133 = sphi 0, %s133
    %s135 = sphi 0, %s133
    %s136 = sphi 0, %s135
    %s150 = sphi 0, %s136
    %s154 = sphi 0, %s154
    %s156 = sphi 0, %s154
    %s157 = sphi 0, %s156
    %s171 = sphi 0, %s157
    %s175 = sphi 0, %s175
    %s177 = sphi 0, %s175
    %s178 = sphi 0, %s177
    %s192 = sphi 0, %s178
    %s196 = sphi 0, %s196
    %s198 = sphi 0, %s196
    %s199 = sphi 0, %s198
    %s213 = sphi 0, %s199
    %s219 = sphi 0, %s221
    %s222 = sphi 0, %s219
    %s223 = sphi 0, %s222
    %s239 = sphi 0, %s223
  $region4: #{zone_prediction_forward.1} parent=0 // loop_header_branch
    %18 = sbr.rel (%p16) target = $region8
  $region5: #{zone_prediction_forward.1} parent=0 // loop_body
    %s20 = ssub.s32 %s15, 1
    %s21 = ssub.s32 %s15, 2
    %s22 = sadd.s32 %s15, 1
    %s23 = ssub.s32 %s15, %s22
    %p24 = scmp.eq.s32.totalorder %s23, 0
    %s26 = sadd.s32 %s25, 1
    %s27 = scalar_select %p24, %s25, %s26
    %p30 = pneg %p24
    %p31 = scmp.eq.s32.totalorder %s15, 3
    %p32 = por %p30, %p31
    %p33 = scmp.ne.s32.totalorder %s25, %s28
    %p34 = scmp.eq.s32.totalorder %s15, 0
    %p35 = por %p33, %p34
    %p36 = scmp.ne.s32.totalorder %s25, %s28
    %p37 = scmp.eq.s32.totalorder %s20, 3
    %p38 = por %p36, %p37
    %p39 = scmp.ne.s32.totalorder %s28, %s29
    %p40 = scmp.eq.s32.totalorder %s20, 0
    %p41 = por %p39, %p40
    %p42 = scmp.ne.s32.totalorder %s28, %s29
    %p43 = scmp.eq.s32.totalorder %s21, 3
    %p44 = por %p42, %p43
    %p46 = scmp.ne.s32.totalorder %s29, %s45
    %p47 = scmp.eq.s32.totalorder %s21, 0
    %p48 = por %p46, %p47
    %s50 = sadd.s32 %s49, 1
    %p53 = scmp.eq.s32.totalorder %s15, 3
    %p54 = scmp.ne.s32.totalorder %s49, %s51
    %p55 = scmp.eq.s32.totalorder %s15, 0
    %p56 = por %p54, %p55
    %p57 = scmp.ne.s32.totalorder %s49, %s51
    %p58 = scmp.eq.s32.totalorder %s20, 3
    %p59 = por %p57, %p58
    %p60 = scmp.ne.s32.totalorder %s51, %s52
    %p61 = scmp.eq.s32.totalorder %s20, 0
    %p62 = por %p60, %p61
    %p63 = scmp.ne.s32.totalorder %s51, %s52
    %p64 = scmp.eq.s32.totalorder %s21, 3
    %p65 = por %p63, %p64
    %p67 = scmp.ne.s32.totalorder %s52, %s66
    %p68 = scmp.eq.s32.totalorder %s21, 0
    %p69 = por %p67, %p68
    %s71 = sadd.s32 %s70, 1
    %p74 = scmp.eq.s32.totalorder %s15, 3
    %p75 = scmp.ne.s32.totalorder %s70, %s72
    %p76 = scmp.eq.s32.totalorder %s15, 0
    %p77 = por %p75, %p76
    %p78 = scmp.ne.s32.totalorder %s70, %s72
    %p79 = scmp.eq.s32.totalorder %s20, 3
    %p80 = por %p78, %p79
    %p81 = scmp.ne.s32.totalorder %s72, %s73
    %p82 = scmp.eq.s32.totalorder %s20, 0
    %p83 = por %p81, %p82
    %p84 = scmp.ne.s32.totalorder %s72, %s73
    %p85 = scmp.eq.s32.totalorder %s21, 3
    %p86 = por %p84, %p85
    %p88 = scmp.ne.s32.totalorder %s73, %s87
    %p89 = scmp.eq.s32.totalorder %s21, 0
    %p90 = por %p88, %p89
    %s92 = sadd.s32 %s91, 1
    %p95 = scmp.eq.s32.totalorder %s15, 3
    %p96 = scmp.ne.s32.totalorder %s91, %s93
    %p97 = scmp.eq.s32.totalorder %s15, 0
    %p98 = por %p96, %p97
    %p99 = scmp.ne.s32.totalorder %s91, %s93
    %p100 = scmp.eq.s32.totalorder %s20, 3
    %p101 = por %p99, %p100
    %p102 = scmp.ne.s32.totalorder %s93, %s94
    %p103 = scmp.eq.s32.totalorder %s20, 0
    %p104 = por %p102, %p103
    %p105 = scmp.ne.s32.totalorder %s93, %s94
    %p106 = scmp.eq.s32.totalorder %s21, 3
    %p107 = por %p105, %p106
    %p109 = scmp.ne.s32.totalorder %s94, %s108
    %p110 = scmp.eq.s32.totalorder %s21, 0
    %p111 = por %p109, %p110
    %s113 = sadd.s32 %s112, 1
    %p116 = scmp.eq.s32.totalorder %s15, 3
    %p117 = scmp.ne.s32.totalorder %s112, %s114
    %p118 = scmp.eq.s32.totalorder %s15, 0
    %p119 = por %p117, %p118
    %p120 = scmp.ne.s32.totalorder %s112, %s114
    %p121 = scmp.eq.s32.totalorder %s20, 3
    %p122 = por %p120, %p121
    %p123 = scmp.ne.s32.totalorder %s114, %s115
    %p124 = scmp.eq.s32.totalorder %s20, 0
    %p125 = por %p123, %p124
    %p126 = scmp.ne.s32.totalorder %s114, %s115
    %p127 = scmp.eq.s32.totalorder %s21, 3
    %p128 = por %p126, %p127
    %p130 = scmp.ne.s32.totalorder %s115, %s129
    %p131 = scmp.eq.s32.totalorder %s21, 0
    %p132 = por %p130, %p131
    %s134 = sadd.s32 %s133, 1
    %p137 = scmp.eq.s32.totalorder %s15, 3
    %p138 = scmp.ne.s32.totalorder %s133, %s135
    %p139 = scmp.eq.s32.totalorder %s15, 0
    %p140 = por %p138, %p139
    %p141 = scmp.ne.s32.totalorder %s133, %s135
    %p142 = scmp.eq.s32.totalorder %s20, 3
    %p143 = por %p141, %p142
    %p144 = scmp.ne.s32.totalorder %s135, %s136
    %p145 = scmp.eq.s32.totalorder %s20, 0
    %p146 = por %p144, %p145
    %p147 = scmp.ne.s32.totalorder %s135, %s136
    %p148 = scmp.eq.s32.totalorder %s21, 3
    %p149 = por %p147, %p148
    %p151 = scmp.ne.s32.totalorder %s136, %s150
    %p152 = scmp.eq.s32.totalorder %s21, 0
    %p153 = por %p151, %p152
    %s155 = sadd.s32 %s154, 1
    %p158 = scmp.eq.s32.totalorder %s15, 3
    %p159 = scmp.ne.s32.totalorder %s154, %s156
    %p160 = scmp.eq.s32.totalorder %s15, 0
    %p161 = por %p159, %p160
    %p162 = scmp.ne.s32.totalorder %s154, %s156
    %p163 = scmp.eq.s32.totalorder %s20, 3
    %p164 = por %p162, %p163
    %p165 = scmp.ne.s32.totalorder %s156, %s157
    %p166 = scmp.eq.s32.totalorder %s20, 0
    %p167 = por %p165, %p166
    %p168 = scmp.ne.s32.totalorder %s156, %s157
    %p169 = scmp.eq.s32.totalorder %s21, 3
    %p170 = por %p168, %p169
    %p172 = scmp.ne.s32.totalorder %s157, %s171
    %p173 = scmp.eq.s32.totalorder %s21, 0
    %p174 = por %p172, %p173
    %s176 = sadd.s32 %s175, 1
    %p179 = scmp.eq.s32.totalorder %s15, 3
    %p180 = scmp.ne.s32.totalorder %s175, %s177
    %p181 = scmp.eq.s32.totalorder %s15, 0
    %p182 = por %p180, %p181
    %p183 = scmp.ne.s32.totalorder %s175, %s177
    %p184 = scmp.eq.s32.totalorder %s20, 3
    %p185 = por %p183, %p184
    %p186 = scmp.ne.s32.totalorder %s177, %s178
    %p187 = scmp.eq.s32.totalorder %s20, 0
    %p188 = por %p186, %p187
    %p189 = scmp.ne.s32.totalorder %s177, %s178
    %p190 = scmp.eq.s32.totalorder %s21, 3
    %p191 = por %p189, %p190
    %p193 = scmp.ne.s32.totalorder %s178, %s192
    %p194 = scmp.eq.s32.totalorder %s21, 0
    %p195 = por %p193, %p194
    %s197 = sadd.s32 %s196, 1
    %p200 = scmp.eq.s32.totalorder %s15, 3
    %p201 = scmp.ne.s32.totalorder %s196, %s198
    %p202 = scmp.eq.s32.totalorder %s15, 0
    %p203 = por %p201, %p202
    %p204 = scmp.ne.s32.totalorder %s196, %s198
    %p205 = scmp.eq.s32.totalorder %s20, 3
    %p206 = por %p204, %p205
    %p207 = scmp.ne.s32.totalorder %s198, %s199
    %p208 = scmp.eq.s32.totalorder %s20, 0
    %p209 = por %p207, %p208
    %p210 = scmp.ne.s32.totalorder %s198, %s199
    %p211 = scmp.eq.s32.totalorder %s21, 3
    %p212 = por %p210, %p211
    %p214 = scmp.ne.s32.totalorder %s199, %s213
    %p215 = scmp.eq.s32.totalorder %s21, 0
    %p216 = por %p214, %p215
    %s217 = ssub.s32 %s15, %s22
    %p218 = scmp.eq.s32.totalorder %s217, 0
    %s220 = sadd.s32 %s219, 1
    %s221 = scalar_select %p218, %s219, %s220
    %p224 = pneg %p218
    %p225 = scmp.eq.s32.totalorder %s15, 3
    %p226 = por %p224, %p225
    %p227 = scmp.ne.s32.totalorder %s219, %s222
    %p228 = scmp.eq.s32.totalorder %s15, 0
    %p229 = por %p227, %p228
    %p230 = scmp.ne.s32.totalorder %s219, %s222
    %p231 = scmp.eq.s32.totalorder %s20, 3
    %p232 = por %p230, %p231
    %p233 = scmp.ne.s32.totalorder %s222, %s223
    %p234 = scmp.eq.s32.totalorder %s20, 0
    %p235 = por %p233, %p234
    %p236 = scmp.ne.s32.totalorder %s222, %s223
    %p237 = scmp.eq.s32.totalorder %s21, 3
    %p238 = por %p236, %p237
    %p240 = scmp.ne.s32.totalorder %s223, %s239
    %p241 = scmp.eq.s32.totalorder %s21, 0
    %p242 = por %p240, %p241
    %p243 = scmp.le.s32.totalorder 1, %s15
    %p244 = scmp.lt.s32.totalorder %s15, 5
    %p245 = pnand %p243, %p244
    %p246 = pneg %p245
    // Predicated region
    $region9: #{zone_prediction_forward.1} parent=5 // pred_check
      _
    $region10: #{zone_prediction_forward.1} parent=5 // pred_check_branch
      %248 = sbr.rel (%p245) target = $region12
    $region11: #{zone_prediction_forward.1} parent=5 // pred_region
      %s249 = ssub.s32 %s15, 1
      // Predicated region
      $region13: #{zone_prediction_forward.1} parent=11 // pred_check
        %p250 = pneg %p62
      $region14: #{zone_prediction_forward.1} parent=11 // pred_check_branch
        %252 = sbr.rel (%p250) target = $region16
      $region15: #{zone_prediction_forward.1} parent=11 // pred_region
        _
      $region16: #{zone_prediction_forward.1} parent=11 // pred_fallthru
        _
      // Predicated region
      $region17: #{zone_prediction_forward.1} parent=11 // pred_check
        %p253 = pneg %p83
      $region18: #{zone_prediction_forward.1} parent=11 // pred_check_branch
        %255 = sbr.rel (%p253) target = $region20
      $region19: #{zone_prediction_forward.1} parent=11 // pred_region
        _
      $region20: #{zone_prediction_forward.1} parent=11 // pred_fallthru
        _
      // Predicated region
      $region21: #{zone_prediction_forward.1} parent=11 // pred_check
        %p256 = pneg %p104
      $region22: #{zone_prediction_forward.1} parent=11 // pred_check_branch
        %258 = sbr.rel (%p256) target = $region24
      $region23: #{zone_prediction_forward.1} parent=11 // pred_region
        _
      $region24: #{zone_prediction_forward.1} parent=11 // pred_fallthru
        _
      // Predicated region
      $region25: #{zone_prediction_forward.1} parent=11 // pred_check
        %p259 = pneg %p125
      $region26: #{zone_prediction_forward.1} parent=11 // pred_check_branch
        %261 = sbr.rel (%p259) target = $region28
      $region27: #{zone_prediction_forward.1} parent=11 // pred_region
        _
      $region28: #{zone_prediction_forward.1} parent=11 // pred_fallthru
        _
      // Predicated region
      $region29: #{zone_prediction_forward.1} parent=11 // pred_check
        %p262 = pneg %p146
      $region30: #{zone_prediction_forward.1} parent=11 // pred_check_branch
        %264 = sbr.rel (%p262) target = $region32
      $region31: #{zone_prediction_forward.1} parent=11 // pred_region
        _
      $region32: #{zone_prediction_forward.1} parent=11 // pred_fallthru
        _
      // Predicated region
      $region33: #{zone_prediction_forward.1} parent=11 // pred_check
        %p265 = pneg %p167
      $region34: #{zone_prediction_forward.1} parent=11 // pred_check_branch
        %267 = sbr.rel (%p265) target = $region36
      $region35: #{zone_prediction_forward.1} parent=11 // pred_region
        _
      $region36: #{zone_prediction_forward.1} parent=11 // pred_fallthru
        _
      // Predicated region
      $region37: #{zone_prediction_forward.1} parent=11 // pred_check
        %p268 = pneg %p188
      $region38: #{zone_prediction_forward.1} parent=11 // pred_check_branch
        %270 = sbr.rel (%p268) target = $region40
      $region39: #{zone_prediction_forward.1} parent=11 // pred_region
        _
      $region40: #{zone_prediction_forward.1} parent=11 // pred_fallthru
        _
      // Predicated region
      $region41: #{zone_prediction_forward.1} parent=11 // pred_check
        %p271 = pneg %p209
      $region42: #{zone_prediction_forward.1} parent=11 // pred_check_branch
        %273 = sbr.rel (%p271) target = $region44
      $region43: #{zone_prediction_forward.1} parent=11 // pred_region
        _
      $region44: #{zone_prediction_forward.1} parent=11 // pred_fallthru
        _
    $region12: #{zone_prediction_forward.1} parent=5 // pred_fallthru
      _
    %p274 = scmp.lt.s32.totalorder %s15, 4
    // Predicated region
    $region45: #{zone_prediction_forward.1} parent=5 // pred_check
      %p275 = pneg %p274
    $region46: #{zone_prediction_forward.1} parent=5 // pred_check_branch
      %277 = sbr.rel (%p275) target = $region48
    $region47: #{zone_prediction_forward.1} parent=5 // pred_region
      // Predicated region
      $region49: #{zone_prediction_forward.1} parent=47 // pred_check
        %p278 = pneg %p35
      $region50: #{zone_prediction_forward.1} parent=47 // pred_check_branch
        %280 = sbr.rel (%p278) target = $region52
      $region51: #{zone_prediction_forward.1} parent=47 // pred_region
        %s281 = smul.u32 16, %s15
        %p282 = scmp.lt.s32.totalorder %s281, 63
        %s283 = scalar_select %p282, %s281, 63
        %s284 = smul.addr %s283, 8
        %s285 = scalar_lea.vmem %s0, %s284
        %s286 = smul.u32 16, %s15
      $region52: #{zone_prediction_forward.1} parent=47 // pred_fallthru
        _
    $region48: #{zone_prediction_forward.1} parent=5 // pred_fallthru
      _
    %p287 = scmp.le.s32.totalorder 1, %s15
    %p288 = scmp.lt.s32.totalorder %s15, 5
    %p289 = pnand %p287, %p288
    %p290 = pneg %p289
    // Predicated region
    $region53: #{zone_prediction_forward.1} parent=5 // pred_check
      _
    $region54: #{zone_prediction_forward.1} parent=5 // pred_check_branch
      %292 = sbr.rel (%p289) target = $region56
    $region55: #{zone_prediction_forward.1} parent=5 // pred_region
      %s293 = ssub.s32 %s15, 1
      %s294 = smul.u32 16, %s20
      %p295 = scmp.lt.s32.totalorder %s294, 63
      %s296 = scalar_select %p295, %s294, 63
      %s297 = smul.addr %s296, 8
      %s298 = scalar_lea.vmem %s0, %s297
      %p299 = pneg %p41
      %p300 = pneg %p38
      %p301 = pneg %p62
      %p302 = pneg %p59
      %p303 = pneg %p83
      %p304 = pneg %p80
      %p305 = pneg %p104
      %p306 = pneg %p101
      %p307 = pneg %p125
      %p308 = pneg %p122
      %p309 = pneg %p146
      %p310 = pneg %p143
      %p311 = pneg %p167
      %p312 = pneg %p164
      %p313 = pneg %p188
      %p314 = pneg %p185
      %p315 = pneg %p209
      %p316 = pneg %p206
      %p317 = pneg %p235
      %p318 = pneg %p232
      %s319 = smul.u32 16, %s20
      %p320 = scmp.lt.s32.totalorder %s319, 63
      %s321 = scalar_select %p320, %s319, 63
      %s322 = smul.addr %s321, 8
      %s323 = scalar_lea.vmem %s9, %s322
      %s324 = smul.u32 16, %s20
      %p325 = scmp.lt.s32.totalorder %s324, 63
      %s326 = scalar_select %p325, %s324, 63
      %s327 = smul.addr %s326, 8
      %s328 = scalar_lea.vmem %s0, %s327
      %s329 = smul.u32 16, %s20
      %s330 = smul.u32 16, %s20
      %p331 = scmp.lt.s32.totalorder %s330, 63
      %s332 = scalar_select %p331, %s330, 63
      %s333 = smul.addr %s332, 8
      %s334 = scalar_lea.vmem %s9, %s333
      %s335 = smul.u32 16, %s20
      %v337 = vld [vmem:[%s328] sm:$0xff]
      %v338 = vld [vmem:[%s328 + $0x8] sm:$0xff]
      %v339 = vld [vmem:[%s328 + $0x10] sm:$0xff]
      %v340 = vld [vmem:[%s328 + $0x18] sm:$0xff]
      %v341 = vld [vmem:[%s328 + $0x20] sm:$0xff]
      %v342 = vld [vmem:[%s328 + $0x28] sm:$0xff]
      %v343 = vld [vmem:[%s328 + $0x30] sm:$0xff]
      %v344 = vld [vmem:[%s328 + $0x38] sm:$0xff]
      %v345 = vld [vmem:[%s328 + $0x40] sm:$0xff]
      %v346 = vld [vmem:[%s328 + $0x48] sm:$0xff]
      %v347 = vld [vmem:[%s328 + $0x50] sm:$0xff]
      %v348 = vld [vmem:[%s328 + $0x58] sm:$0xff]
      %v349 = vld [vmem:[%s328 + $0x60] sm:$0xff]
      %v350 = vld [vmem:[%s328 + $0x68] sm:$0xff]
      %v351 = vld [vmem:[%s328 + $0x70] sm:$0xff]
      %v352 = vld [vmem:[%s328 + $0x78] sm:$0xff]
      %v353 = vpack.c.bf16 %v338, %v337
      %v354 = vpack.c.bf16 %v340, %v339
      %v355 = vpack.c.bf16 %v342, %v341
      %v356 = vpack.c.bf16 %v344, %v343
      %v357 = vpack.c.bf16 %v346, %v345
      %v358 = vpack.c.bf16 %v348, %v347
      %v359 = vpack.c.bf16 %v350, %v349
      %v360 = vpack.c.bf16 %v352, %v351
      %v361 = vld [vmem:[%s1] sm:$0xf]
      %v362 = vld [vmem:[%s1 + $0x4] sm:$0xf]
      %v363 = vld [vmem:[%s1 + $0x8] sm:$0xf]
      %v364 = vld [vmem:[%s1 + $0xc] sm:$0xf]
      %v365 = vld [vmem:[%s2] sm:$0x1]
      %v367 = vperm.slane %v365, 0
      %v373 = vunpack.c.l.b16 %v361
      %v374 = vunpack.c.l.b16 %v362
      %v375 = vunpack.c.l.b16 %v363
      %v376 = vunpack.c.l.b16 %v364
      %v377 = vpack.c.b16 %v374, %v373
      %v378 = vpack.c.b16 %v376, %v375
      %vm381 = vcmask 261120
      %v383 = vsel %vm381, %v353, 0
      %v386 = vsel %vm381, %v354, 0
      %v389 = vsel %vm381, %v355, 0
      %v392 = vsel %vm381, %v356, 0
      %v395 = vsel %vm381, %v357, 0
      %v398 = vsel %vm381, %v358, 0
      %v401 = vsel %vm381, %v359, 0
      %v404 = vsel %vm381, %v360, 0
      %406 = vmatpush.bf16.msra.mxu0 0
      %407 = vmatpush.bf16.msra.mxu0 0
      %408 = vmatpush.bf16.msra.mxu0 0
      %409 = vmatpush.bf16.msra.mxu0 0
      %410 = vmatpush.bf16.msra.mxu0 0
      %411 = vmatpush.bf16.msra.mxu0 0
      %412 = vmatpush.bf16.msra.mxu0 %v378
      %413 = vmatpush.bf16.msra.mxu0 %v377
      %414 = vmatmul.bf16.gmra.mxu0 %v383
      %v415 = vpop.f32.mrf.mxu0
      %v416 = vadd.f32 %v367, %v415
      %v417 = vpop.f32.mrf.mxu0
      %v418 = vadd.f32 %v367, %v417
      %419 = vmatmul.bf16.gmra.mxu0 %v386
      %v420 = vpop.f32.mrf.mxu0
      %v421 = vadd.f32 %v367, %v420
      %v422 = vpop.f32.mrf.mxu0
      %v423 = vadd.f32 %v367, %v422
      %424 = vmatmul.bf16.gmra.mxu0 %v389
      %v425 = vpop.f32.mrf.mxu0
      %v426 = vadd.f32 %v367, %v425
      %v427 = vpop.f32.mrf.mxu0
      %v428 = vadd.f32 %v367, %v427
      %429 = vmatmul.bf16.gmra.mxu0 %v392
      %v430 = vpop.f32.mrf.mxu0
      %v431 = vadd.f32 %v367, %v430
      %v432 = vpop.f32.mrf.mxu0
      %v433 = vadd.f32 %v367, %v432
      %434 = vmatmul.bf16.gmra.mxu0 %v395
      %v435 = vpop.f32.mrf.mxu0
      %v436 = vadd.f32 %v367, %v435
      %v437 = vpop.f32.mrf.mxu0
      %v438 = vadd.f32 %v367, %v437
      %439 = vmatmul.bf16.gmra.mxu0 %v398
      %v440 = vpop.f32.mrf.mxu0
      %v441 = vadd.f32 %v367, %v440
      %v442 = vpop.f32.mrf.mxu0
      %v443 = vadd.f32 %v367, %v442
      %444 = vmatmul.bf16.gmra.mxu0 %v401
      %v445 = vpop.f32.mrf.mxu0
      %v446 = vadd.f32 %v367, %v445
      %v447 = vpop.f32.mrf.mxu0
      %v448 = vadd.f32 %v367, %v447
      %449 = vmatmul.bf16.gmra.mxu0 %v404
      %v450 = vpop.f32.mrf.mxu0
      %v451 = vadd.f32 %v367, %v450
      %v452 = vpop.f32.mrf.mxu0
      %v453 = vadd.f32 %v367, %v452
      %454 = vdwg.mxu0
      %v455 = vmax.f32 %v416, 0.0
      %v456 = vmax.f32 %v418, 0.0
      %v457 = vmax.f32 %v421, 0.0
      %v458 = vmax.f32 %v423, 0.0
      %v459 = vmax.f32 %v426, 0.0
      %v460 = vmax.f32 %v428, 0.0
      %v461 = vmax.f32 %v431, 0.0
      %v462 = vmax.f32 %v433, 0.0
      %v463 = vmax.f32 %v436, 0.0
      %v464 = vmax.f32 %v438, 0.0
      %v465 = vmax.f32 %v441, 0.0
      %v466 = vmax.f32 %v443, 0.0
      %v467 = vmax.f32 %v446, 0.0
      %v468 = vmax.f32 %v448, 0.0
      %v469 = vmax.f32 %v451, 0.0
      %v470 = vmax.f32 %v453, 0.0
      %v471 = vpack.c.bf16 %v456, %v455
      %v472 = vpack.c.bf16 %v458, %v457
      %v473 = vpack.c.bf16 %v460, %v459
      %v474 = vpack.c.bf16 %v462, %v461
      %v475 = vpack.c.bf16 %v464, %v463
      %v476 = vpack.c.bf16 %v466, %v465
      %v477 = vpack.c.bf16 %v468, %v467
      %v478 = vpack.c.bf16 %v470, %v469
      %v479 = vld [vmem:[%s3] sm:$0xff]
      %v480 = vld [vmem:[%s3 + $0x8] sm:$0xff]
      %v481 = vld [vmem:[%s3 + $0x10] sm:$0xff]
      %v482 = vld [vmem:[%s3 + $0x18] sm:$0xff]
      %v483 = vld [vmem:[%s3 + $0x20] sm:$0xff]
      %v484 = vld [vmem:[%s3 + $0x28] sm:$0xff]
      %v485 = vld [vmem:[%s3 + $0x30] sm:$0xff]
      %v486 = vld [vmem:[%s3 + $0x38] sm:$0xff]
      %v487 = vld [vmem:[%s3 + $0x40] sm:$0xff]
      %v488 = vld [vmem:[%s3 + $0x48] sm:$0xff]
      %v489 = vld [vmem:[%s3 + $0x50] sm:$0xff]
      %v490 = vld [vmem:[%s3 + $0x58] sm:$0xff]
      %v491 = vld [vmem:[%s3 + $0x60] sm:$0xff]
      %v492 = vld [vmem:[%s3 + $0x68] sm:$0xff]
      %v493 = vld [vmem:[%s3 + $0x70] sm:$0xff]
      %v494 = vld [vmem:[%s3 + $0x78] sm:$0xff]
      %v495 = vld [vmem:[%s4] sm:$0x3]
      %v497 = vperm.slane %v495, 0
      %v498 = vperm.slane %v495, 1
      %v517 = vunpack.c.l.b16 %v479
      %v518 = vunpack.c.h.b16 %v479
      %v519 = vunpack.c.l.b16 %v480
      %v520 = vunpack.c.h.b16 %v480
      %v521 = vunpack.c.l.b16 %v481
      %v522 = vunpack.c.h.b16 %v481
      %v523 = vunpack.c.l.b16 %v482
      %v524 = vunpack.c.h.b16 %v482
      %v525 = vunpack.c.l.b16 %v483
      %v526 = vunpack.c.h.b16 %v483
      %v527 = vunpack.c.l.b16 %v484
      %v528 = vunpack.c.h.b16 %v484
      %v529 = vunpack.c.l.b16 %v485
      %v530 = vunpack.c.h.b16 %v485
      %v531 = vunpack.c.l.b16 %v486
      %v532 = vunpack.c.h.b16 %v486
      %v533 = vunpack.c.l.b16 %v487
      %v534 = vunpack.c.h.b16 %v487
      %v535 = vunpack.c.l.b16 %v488
      %v536 = vunpack.c.h.b16 %v488
      %v537 = vunpack.c.l.b16 %v489
      %v538 = vunpack.c.h.b16 %v489
      %v539 = vunpack.c.l.b16 %v490
      %v540 = vunpack.c.h.b16 %v490
      %v541 = vunpack.c.l.b16 %v491
      %v542 = vunpack.c.h.b16 %v491
      %v543 = vunpack.c.l.b16 %v492
      %v544 = vunpack.c.h.b16 %v492
      %v545 = vunpack.c.l.b16 %v493
      %v546 = vunpack.c.h.b16 %v493
      %v547 = vunpack.c.l.b16 %v494
      %v548 = vunpack.c.h.b16 %v494
      %v549 = vpack.c.b16 %v519, %v517
      %v550 = vpack.c.b16 %v520, %v518
      %v551 = vpack.c.b16 %v523, %v521
      %v552 = vpack.c.b16 %v524, %v522
      %v553 = vpack.c.b16 %v527, %v525
      %v554 = vpack.c.b16 %v528, %v526
      %v555 = vpack.c.b16 %v531, %v529
      %v556 = vpack.c.b16 %v532, %v530
      %v557 = vpack.c.b16 %v535, %v533
      %v558 = vpack.c.b16 %v536, %v534
      %v559 = vpack.c.b16 %v539, %v537
      %v560 = vpack.c.b16 %v540, %v538
      %v561 = vpack.c.b16 %v543, %v541
      %v562 = vpack.c.b16 %v544, %v542
      %v563 = vpack.c.b16 %v547, %v545
      %v564 = vpack.c.b16 %v548, %v546
      %581 = vmatpush.bf16.msra.mxu0 %v563
      %582 = vmatpush.bf16.msra.mxu0 %v561
      %583 = vmatpush.bf16.msra.mxu0 %v559
      %584 = vmatpush.bf16.msra.mxu0 %v557
      %585 = vmatpush.bf16.msra.mxu0 %v555
      %586 = vmatpush.bf16.msra.mxu0 %v553
      %587 = vmatpush.bf16.msra.mxu0 %v551
      %588 = vmatpush.bf16.msra.mxu0 %v549
      %589 = vmatmul.bf16.gmra.mxu0 %v471
      %v590 = vpop.f32.mrf.mxu0
      %v591 = vadd.f32 %v497, %v590
      %v592 = vpop.f32.mrf.mxu0
      %v593 = vadd.f32 %v497, %v592
      %594 = vmatmul.bf16.gmra.mxu0 %v472
      %v595 = vpop.f32.mrf.mxu0
      %v596 = vadd.f32 %v497, %v595
      %v597 = vpop.f32.mrf.mxu0
      %v598 = vadd.f32 %v497, %v597
      %599 = vmatmul.bf16.gmra.mxu0 %v473
      %v600 = vpop.f32.mrf.mxu0
      %v601 = vadd.f32 %v497, %v600
      %v602 = vpop.f32.mrf.mxu0
      %v603 = vadd.f32 %v497, %v602
      %604 = vmatmul.bf16.gmra.mxu0 %v474
      %v605 = vpop.f32.mrf.mxu0
      %v606 = vadd.f32 %v497, %v605
      %v607 = vpop.f32.mrf.mxu0
      %v608 = vadd.f32 %v497, %v607
      %609 = vmatmul.bf16.gmra.mxu0 %v475
      %v610 = vpop.f32.mrf.mxu0
      %v611 = vadd.f32 %v497, %v610
      %v612 = vpop.f32.mrf.mxu0
      %v613 = vadd.f32 %v497, %v612
      %614 = vmatmul.bf16.gmra.mxu0 %v476
      %v615 = vpop.f32.mrf.mxu0
      %v616 = vadd.f32 %v497, %v615
      %v617 = vpop.f32.mrf.mxu0
      %v618 = vadd.f32 %v497, %v617
      %619 = vmatmul.bf16.gmra.mxu0 %v477
      %v620 = vpop.f32.mrf.mxu0
      %v621 = vadd.f32 %v497, %v620
      %v622 = vpop.f32.mrf.mxu0
      %v623 = vadd.f32 %v497, %v622
      %624 = vmatmul.bf16.gmra.mxu0 %v478
      %v625 = vpop.f32.mrf.mxu0
      %v626 = vadd.f32 %v497, %v625
      %v627 = vpop.f32.mrf.mxu0
      %v628 = vadd.f32 %v497, %v627
      %629 = vdwg.mxu0
      %630 = vmatpush.bf16.msra.mxu0 %v564
      %631 = vmatpush.bf16.msra.mxu0 %v562
      %632 = vmatpush.bf16.msra.mxu0 %v560
      %633 = vmatpush.bf16.msra.mxu0 %v558
      %634 = vmatpush.bf16.msra.mxu0 %v556
      %635 = vmatpush.bf16.msra.mxu0 %v554
      %636 = vmatpush.bf16.msra.mxu0 %v552
      %637 = vmatpush.bf16.msra.mxu0 %v550
      %638 = vmatmul.bf16.gmra.mxu0 %v471
      %v639 = vpop.f32.mrf.mxu0
      %v640 = vadd.f32 %v498, %v639
      %v641 = vpop.f32.mrf.mxu0
      %v642 = vadd.f32 %v498, %v641
      %643 = vmatmul.bf16.gmra.mxu0 %v472
      %v644 = vpop.f32.mrf.mxu0
      %v645 = vadd.f32 %v498, %v644
      %v646 = vpop.f32.mrf.mxu0
      %v647 = vadd.f32 %v498, %v646
      %648 = vmatmul.bf16.gmra.mxu0 %v473
      %v649 = vpop.f32.mrf.mxu0
      %v650 = vadd.f32 %v498, %v649
      %v651 = vpop.f32.mrf.mxu0
      %v652 = vadd.f32 %v498, %v651
      %653 = vmatmul.bf16.gmra.mxu0 %v474
      %v654 = vpop.f32.mrf.mxu0
      %v655 = vadd.f32 %v498, %v654
      %v656 = vpop.f32.mrf.mxu0
      %v657 = vadd.f32 %v498, %v656
      %658 = vmatmul.bf16.gmra.mxu0 %v475
      %v659 = vpop.f32.mrf.mxu0
      %v660 = vadd.f32 %v498, %v659
      %v661 = vpop.f32.mrf.mxu0
      %v662 = vadd.f32 %v498, %v661
      %663 = vmatmul.bf16.gmra.mxu0 %v476
      %v664 = vpop.f32.mrf.mxu0
      %v665 = vadd.f32 %v498, %v664
      %v666 = vpop.f32.mrf.mxu0
      %v667 = vadd.f32 %v498, %v666
      %668 = vmatmul.bf16.gmra.mxu0 %v477
      %v669 = vpop.f32.mrf.mxu0
      %v670 = vadd.f32 %v498, %v669
      %v671 = vpop.f32.mrf.mxu0
      %v672 = vadd.f32 %v498, %v671
      %673 = vmatmul.bf16.gmra.mxu0 %v478
      %v674 = vpop.f32.mrf.mxu0
      %v675 = vadd.f32 %v498, %v674
      %v676 = vpop.f32.mrf.mxu0
      %v677 = vadd.f32 %v498, %v676
      %678 = vdwg.mxu0
      %v679 = vmax.f32 %v591, 0.0
      %v680 = vmax.f32 %v640, 0.0
      %v681 = vmax.f32 %v593, 0.0
      %v682 = vmax.f32 %v642, 0.0
      %v683 = vmax.f32 %v596, 0.0
      %v684 = vmax.f32 %v645, 0.0
      %v685 = vmax.f32 %v598, 0.0
      %v686 = vmax.f32 %v647, 0.0
      %v687 = vmax.f32 %v601, 0.0
      %v688 = vmax.f32 %v650, 0.0
      %v689 = vmax.f32 %v603, 0.0
      %v690 = vmax.f32 %v652, 0.0
      %v691 = vmax.f32 %v606, 0.0
      %v692 = vmax.f32 %v655, 0.0
      %v693 = vmax.f32 %v608, 0.0
      %v694 = vmax.f32 %v657, 0.0
      %v695 = vmax.f32 %v611, 0.0
      %v696 = vmax.f32 %v660, 0.0
      %v697 = vmax.f32 %v613, 0.0
      %v698 = vmax.f32 %v662, 0.0
      %v699 = vmax.f32 %v616, 0.0
      %v700 = vmax.f32 %v665, 0.0
      %v701 = vmax.f32 %v618, 0.0
      %v702 = vmax.f32 %v667, 0.0
      %v703 = vmax.f32 %v621, 0.0
      %v704 = vmax.f32 %v670, 0.0
      %v705 = vmax.f32 %v623, 0.0
      %v706 = vmax.f32 %v672, 0.0
      %v707 = vmax.f32 %v626, 0.0
      %v708 = vmax.f32 %v675, 0.0
      %v709 = vmax.f32 %v628, 0.0
      %v710 = vmax.f32 %v677, 0.0
      %v711 = vpack.c.bf16 %v681, %v679
      %v712 = vpack.c.bf16 %v682, %v680
      %v713 = vpack.c.bf16 %v685, %v683
      %v714 = vpack.c.bf16 %v686, %v684
      %v715 = vpack.c.bf16 %v689, %v687
      %v716 = vpack.c.bf16 %v690, %v688
      %v717 = vpack.c.bf16 %v693, %v691
      %v718 = vpack.c.bf16 %v694, %v692
      %v719 = vpack.c.bf16 %v697, %v695
      %v720 = vpack.c.bf16 %v698, %v696
      %v721 = vpack.c.bf16 %v701, %v699
      %v722 = vpack.c.bf16 %v702, %v700
      %v723 = vpack.c.bf16 %v705, %v703
      %v724 = vpack.c.bf16 %v706, %v704
      %v725 = vpack.c.bf16 %v709, %v707
      %v726 = vpack.c.bf16 %v710, %v708
      %v727 = vld [vmem:[%s5] sm:$0xf]
      %v728 = vld [vmem:[%s5 + $0x4] sm:$0xf]
      %v729 = vld [vmem:[%s5 + $0x8] sm:$0xf]
      %v730 = vld [vmem:[%s5 + $0xc] sm:$0xf]
      %v731 = vld [vmem:[%s5 + $0x10] sm:$0xf]
      %v732 = vld [vmem:[%s5 + $0x14] sm:$0xf]
      %v733 = vld [vmem:[%s5 + $0x18] sm:$0xf]
      %v734 = vld [vmem:[%s5 + $0x1c] sm:$0xf]
      %v735 = vld [vmem:[%s5 + $0x20] sm:$0xf]
      %v736 = vld [vmem:[%s5 + $0x24] sm:$0xf]
      %v737 = vld [vmem:[%s5 + $0x28] sm:$0xf]
      %v738 = vld [vmem:[%s5 + $0x2c] sm:$0xf]
      %v739 = vld [vmem:[%s5 + $0x30] sm:$0xf]
      %v740 = vld [vmem:[%s5 + $0x34] sm:$0xf]
      %v741 = vld [vmem:[%s5 + $0x38] sm:$0xf]
      %v742 = vld [vmem:[%s5 + $0x3c] sm:$0xf]
      %v743 = vld [vmem:[%s5 + $0x40] sm:$0xf]
      %v744 = vld [vmem:[%s5 + $0x44] sm:$0xf]
      %v745 = vld [vmem:[%s5 + $0x48] sm:$0xf]
      %v746 = vld [vmem:[%s5 + $0x4c] sm:$0xf]
      %v747 = vld [vmem:[%s5 + $0x50] sm:$0xf]
      %v748 = vld [vmem:[%s5 + $0x54] sm:$0xf]
      %v749 = vld [vmem:[%s5 + $0x58] sm:$0xf]
      %v750 = vld [vmem:[%s5 + $0x5c] sm:$0xf]
      %v751 = vld [vmem:[%s5 + $0x60] sm:$0xf]
      %v752 = vld [vmem:[%s5 + $0x64] sm:$0xf]
      %v753 = vld [vmem:[%s5 + $0x68] sm:$0xf]
      %v754 = vld [vmem:[%s5 + $0x6c] sm:$0xf]
      %v755 = vld [vmem:[%s5 + $0x70] sm:$0xf]
      %v756 = vld [vmem:[%s5 + $0x74] sm:$0xf]
      %v757 = vld [vmem:[%s5 + $0x78] sm:$0xf]
      %v758 = vld [vmem:[%s5 + $0x7c] sm:$0xf]
      %v759 = vld [vmem:[%s6] sm:$0x1]
      %v761 = vperm.slane %v759, 0
      %v795 = vunpack.c.l.b16 %v727
      %v796 = vunpack.c.l.b16 %v728
      %v797 = vunpack.c.l.b16 %v729
      %v798 = vunpack.c.l.b16 %v730
      %v799 = vunpack.c.l.b16 %v731
      %v800 = vunpack.c.l.b16 %v732
      %v801 = vunpack.c.l.b16 %v733
      %v802 = vunpack.c.l.b16 %v734
      %v803 = vunpack.c.l.b16 %v735
      %v804 = vunpack.c.l.b16 %v736
      %v805 = vunpack.c.l.b16 %v737
      %v806 = vunpack.c.l.b16 %v738
      %v807 = vunpack.c.l.b16 %v739
      %v808 = vunpack.c.l.b16 %v740
      %v809 = vunpack.c.l.b16 %v741
      %v810 = vunpack.c.l.b16 %v742
      %v811 = vunpack.c.l.b16 %v743
      %v812 = vunpack.c.l.b16 %v744
      %v813 = vunpack.c.l.b16 %v745
      %v814 = vunpack.c.l.b16 %v746
      %v815 = vunpack.c.l.b16 %v747
      %v816 = vunpack.c.l.b16 %v748
      %v817 = vunpack.c.l.b16 %v749
      %v818 = vunpack.c.l.b16 %v750
      %v819 = vunpack.c.l.b16 %v751
      %v820 = vunpack.c.l.b16 %v752
      %v821 = vunpack.c.l.b16 %v753
      %v822 = vunpack.c.l.b16 %v754
      %v823 = vunpack.c.l.b16 %v755
      %v824 = vunpack.c.l.b16 %v756
      %v825 = vunpack.c.l.b16 %v757
      %v826 = vunpack.c.l.b16 %v758
      %v827 = vpack.c.b16 %v796, %v795
      %v828 = vpack.c.b16 %v798, %v797
      %v829 = vpack.c.b16 %v800, %v799
      %v830 = vpack.c.b16 %v802, %v801
      %v831 = vpack.c.b16 %v804, %v803
      %v832 = vpack.c.b16 %v806, %v805
      %v833 = vpack.c.b16 %v808, %v807
      %v834 = vpack.c.b16 %v810, %v809
      %v835 = vpack.c.b16 %v812, %v811
      %v836 = vpack.c.b16 %v814, %v813
      %v837 = vpack.c.b16 %v816, %v815
      %v838 = vpack.c.b16 %v818, %v817
      %v839 = vpack.c.b16 %v820, %v819
      %v840 = vpack.c.b16 %v822, %v821
      %v841 = vpack.c.b16 %v824, %v823
      %v842 = vpack.c.b16 %v826, %v825
      %859 = vmatpush.bf16.msra.mxu0 %v834
      %860 = vmatpush.bf16.msra.mxu0 %v833
      %861 = vmatpush.bf16.msra.mxu0 %v832
      %862 = vmatpush.bf16.msra.mxu0 %v831
      %863 = vmatpush.bf16.msra.mxu0 %v830
      %864 = vmatpush.bf16.msra.mxu0 %v829
      %865 = vmatpush.bf16.msra.mxu0 %v828
      %866 = vmatpush.bf16.msra.mxu0 %v827
      %867 = vmatmul.bf16.gmra.mxu0 %v711
      %v868 = vpop.f32.mrf.mxu0
      %v869 = vadd.f32 %v761, %v868
      %v870 = vpop.f32.mrf.mxu0
      %v871 = vadd.f32 %v761, %v870
      %872 = vmatmul.bf16.gmra.mxu0 %v713
      %v873 = vpop.f32.mrf.mxu0
      %v874 = vadd.f32 %v761, %v873
      %v875 = vpop.f32.mrf.mxu0
      %v876 = vadd.f32 %v761, %v875
      %877 = vmatmul.bf16.gmra.mxu0 %v715
      %v878 = vpop.f32.mrf.mxu0
      %v879 = vadd.f32 %v761, %v878
      %v880 = vpop.f32.mrf.mxu0
      %v881 = vadd.f32 %v761, %v880
      %882 = vmatmul.bf16.gmra.mxu0 %v717
      %v883 = vpop.f32.mrf.mxu0
      %v884 = vadd.f32 %v761, %v883
      %v885 = vpop.f32.mrf.mxu0
      %v886 = vadd.f32 %v761, %v885
      %887 = vmatmul.bf16.gmra.mxu0 %v719
      %v888 = vpop.f32.mrf.mxu0
      %v889 = vadd.f32 %v761, %v888
      %v890 = vpop.f32.mrf.mxu0
      %v891 = vadd.f32 %v761, %v890
      %892 = vmatmul.bf16.gmra.mxu0 %v721
      %v893 = vpop.f32.mrf.mxu0
      %v894 = vadd.f32 %v761, %v893
      %v895 = vpop.f32.mrf.mxu0
      %v896 = vadd.f32 %v761, %v895
      %897 = vmatmul.bf16.gmra.mxu0 %v723
      %v898 = vpop.f32.mrf.mxu0
      %v899 = vadd.f32 %v761, %v898
      %v900 = vpop.f32.mrf.mxu0
      %v901 = vadd.f32 %v761, %v900
      %902 = vmatmul.bf16.gmra.mxu0 %v725
      %v903 = vpop.f32.mrf.mxu0
      %v904 = vadd.f32 %v761, %v903
      %v905 = vpop.f32.mrf.mxu0
      %v906 = vadd.f32 %v761, %v905
      %907 = vdwg.mxu0
      %908 = vmatpush.bf16.msra.mxu0 %v842
      %909 = vmatpush.bf16.msra.mxu0 %v841
      %910 = vmatpush.bf16.msra.mxu0 %v840
      %911 = vmatpush.bf16.msra.mxu0 %v839
      %912 = vmatpush.bf16.msra.mxu0 %v838
      %913 = vmatpush.bf16.msra.mxu0 %v837
      %914 = vmatpush.bf16.msra.mxu0 %v836
      %915 = vmatpush.bf16.msra.mxu0 %v835
      %916 = vmatmul.bf16.gmra.mxu0 %v712
      %v917 = vpop.f32.mrf.mxu0
      %v918 = vadd.f32 %v869, %v917
      %v919 = vpop.f32.mrf.mxu0
      %v920 = vadd.f32 %v871, %v919
      %921 = vmatmul.bf16.gmra.mxu0 %v714
      %v922 = vpop.f32.mrf.mxu0
      %v923 = vadd.f32 %v874, %v922
      %v924 = vpop.f32.mrf.mxu0
      %v925 = vadd.f32 %v876, %v924
      %926 = vmatmul.bf16.gmra.mxu0 %v716
      %v927 = vpop.f32.mrf.mxu0
      %v928 = vadd.f32 %v879, %v927
      %v929 = vpop.f32.mrf.mxu0
      %v930 = vadd.f32 %v881, %v929
      %931 = vmatmul.bf16.gmra.mxu0 %v718
      %v932 = vpop.f32.mrf.mxu0
      %v933 = vadd.f32 %v884, %v932
      %v934 = vpop.f32.mrf.mxu0
      %v935 = vadd.f32 %v886, %v934
      %936 = vmatmul.bf16.gmra.mxu0 %v720
      %v937 = vpop.f32.mrf.mxu0
      %v938 = vadd.f32 %v889, %v937
      %v939 = vpop.f32.mrf.mxu0
      %v940 = vadd.f32 %v891, %v939
      %941 = vmatmul.bf16.gmra.mxu0 %v722
      %v942 = vpop.f32.mrf.mxu0
      %v943 = vadd.f32 %v894, %v942
      %v944 = vpop.f32.mrf.mxu0
      %v945 = vadd.f32 %v896, %v944
      %946 = vmatmul.bf16.gmra.mxu0 %v724
      %v947 = vpop.f32.mrf.mxu0
      %v948 = vadd.f32 %v899, %v947
      %v949 = vpop.f32.mrf.mxu0
      %v950 = vadd.f32 %v901, %v949
      %951 = vmatmul.bf16.gmra.mxu0 %v726
      %v952 = vpop.f32.mrf.mxu0
      %v953 = vadd.f32 %v904, %v952
      %v954 = vpop.f32.mrf.mxu0
      %v955 = vadd.f32 %v906, %v954
      %956 = vdwg.mxu0
      %v957 = vmax.f32 %v918, 0.0
      %v958 = vmax.f32 %v920, 0.0
      %v959 = vmax.f32 %v923, 0.0
      %v960 = vmax.f32 %v925, 0.0
      %v961 = vmax.f32 %v928, 0.0
      %v962 = vmax.f32 %v930, 0.0
      %v963 = vmax.f32 %v933, 0.0
      %v964 = vmax.f32 %v935, 0.0
      %v965 = vmax.f32 %v938, 0.0
      %v966 = vmax.f32 %v940, 0.0
      %v967 = vmax.f32 %v943, 0.0
      %v968 = vmax.f32 %v945, 0.0
      %v969 = vmax.f32 %v948, 0.0
      %v970 = vmax.f32 %v950, 0.0
      %v971 = vmax.f32 %v953, 0.0
      %v972 = vmax.f32 %v955, 0.0
      %v973 = vpack.c.bf16 %v958, %v957
      %v974 = vpack.c.bf16 %v960, %v959
      %v975 = vpack.c.bf16 %v962, %v961
      %v976 = vpack.c.bf16 %v964, %v963
      %v977 = vpack.c.bf16 %v966, %v965
      %v978 = vpack.c.bf16 %v968, %v967
      %v979 = vpack.c.bf16 %v970, %v969
      %v980 = vpack.c.bf16 %v972, %v971
      %v981 = vld [vmem:[%s7] sm:$0xf]
      %v982 = vld [vmem:[%s7 + $0x4] sm:$0xf]
      %v983 = vld [vmem:[%s7 + $0x8] sm:$0xf]
      %v984 = vld [vmem:[%s7 + $0xc] sm:$0xf]
      %v985 = vld [vmem:[%s7 + $0x10] sm:$0xf]
      %v986 = vld [vmem:[%s7 + $0x14] sm:$0xf]
      %v987 = vld [vmem:[%s7 + $0x18] sm:$0xf]
      %v988 = vld [vmem:[%s7 + $0x1c] sm:$0xf]
      %v989 = vld [vmem:[%s7 + $0x20] sm:$0xf]
      %v990 = vld [vmem:[%s7 + $0x24] sm:$0xf]
      %v991 = vld [vmem:[%s7 + $0x28] sm:$0xf]
      %v992 = vld [vmem:[%s7 + $0x2c] sm:$0xf]
      %v993 = vld [vmem:[%s7 + $0x30] sm:$0xf]
      %v994 = vld [vmem:[%s7 + $0x34] sm:$0xf]
      %v995 = vld [vmem:[%s7 + $0x38] sm:$0xf]
      %v996 = vld [vmem:[%s7 + $0x3c] sm:$0xf]
      %v997 = vld [vmem:[%s8] sm:$0x1]
      %v999 = vperm.slane %v997, 0
      %v1017 = vunpack.c.l.b16 %v981
      %v1018 = vunpack.c.l.b16 %v982
      %v1019 = vunpack.c.l.b16 %v983
      %v1020 = vunpack.c.l.b16 %v984
      %v1021 = vunpack.c.l.b16 %v985
      %v1022 = vunpack.c.l.b16 %v986
      %v1023 = vunpack.c.l.b16 %v987
      %v1024 = vunpack.c.l.b16 %v988
      %v1025 = vunpack.c.l.b16 %v989
      %v1026 = vunpack.c.l.b16 %v990
      %v1027 = vunpack.c.l.b16 %v991
      %v1028 = vunpack.c.l.b16 %v992
      %v1029 = vunpack.c.l.b16 %v993
      %v1030 = vunpack.c.l.b16 %v994
      %v1031 = vunpack.c.l.b16 %v995
      %v1032 = vunpack.c.l.b16 %v996
      %v1033 = vpack.c.b16 %v1018, %v1017
      %v1034 = vpack.c.b16 %v1020, %v1019
      %v1035 = vpack.c.b16 %v1022, %v1021
      %v1036 = vpack.c.b16 %v1024, %v1023
      %v1037 = vpack.c.b16 %v1026, %v1025
      %v1038 = vpack.c.b16 %v1028, %v1027
      %v1039 = vpack.c.b16 %v1030, %v1029
      %v1040 = vpack.c.b16 %v1032, %v1031
      %1049 = vmatpush.bf16.msra.mxu0 %v1040
      %1050 = vmatpush.bf16.msra.mxu0 %v1039
      %1051 = vmatpush.bf16.msra.mxu0 %v1038
      %1052 = vmatpush.bf16.msra.mxu0 %v1037
      %1053 = vmatpush.bf16.msra.mxu0 %v1036
      %1054 = vmatpush.bf16.msra.mxu0 %v1035
      %1055 = vmatpush.bf16.msra.mxu0 %v1034
      %1056 = vmatpush.bf16.msra.mxu0 %v1033
      %1057 = vmatmul.bf16.gmra.mxu0 %v973
      %v1058 = vpop.f32.mrf.mxu0
      %v1059 = vadd.f32 %v999, %v1058
      %v1060 = vpop.f32.mrf.mxu0
      %v1061 = vadd.f32 %v999, %v1060
      %1062 = vmatmul.bf16.gmra.mxu0 %v974
      %v1063 = vpop.f32.mrf.mxu0
      %v1064 = vadd.f32 %v999, %v1063
      %v1065 = vpop.f32.mrf.mxu0
      %v1066 = vadd.f32 %v999, %v1065
      %1067 = vmatmul.bf16.gmra.mxu0 %v975
      %v1068 = vpop.f32.mrf.mxu0
      %v1069 = vadd.f32 %v999, %v1068
      %v1070 = vpop.f32.mrf.mxu0
      %v1071 = vadd.f32 %v999, %v1070
      %1072 = vmatmul.bf16.gmra.mxu0 %v976
      %v1073 = vpop.f32.mrf.mxu0
      %v1074 = vadd.f32 %v999, %v1073
      %v1075 = vpop.f32.mrf.mxu0
      %v1076 = vadd.f32 %v999, %v1075
      %1077 = vmatmul.bf16.gmra.mxu0 %v977
      %v1078 = vpop.f32.mrf.mxu0
      %v1079 = vadd.f32 %v999, %v1078
      %v1080 = vpop.f32.mrf.mxu0
      %v1081 = vadd.f32 %v999, %v1080
      %1082 = vmatmul.bf16.gmra.mxu0 %v978
      %v1083 = vpop.f32.mrf.mxu0
      %v1084 = vadd.f32 %v999, %v1083
      %v1085 = vpop.f32.mrf.mxu0
      %v1086 = vadd.f32 %v999, %v1085
      %1087 = vmatmul.bf16.gmra.mxu0 %v979
      %v1088 = vpop.f32.mrf.mxu0
      %v1089 = vadd.f32 %v999, %v1088
      %v1090 = vpop.f32.mrf.mxu0
      %v1091 = vadd.f32 %v999, %v1090
      %1092 = vmatmul.bf16.gmra.mxu0 %v980
      %v1093 = vpop.f32.mrf.mxu0
      %v1094 = vadd.f32 %v999, %v1093
      %v1095 = vpop.f32.mrf.mxu0
      %v1096 = vadd.f32 %v999, %v1095
      %1097 = vdwg.mxu0
      %vm1098 = vcmask 23552
      %1099 = vst.msk [vmem:[%s334] sm:$0xff] %vm1098, %v1059
      %1100 = vst.msk [vmem:[%s334 + $0x8] sm:$0xff] %vm1098, %v1061
      %1101 = vst.msk [vmem:[%s334 + $0x10] sm:$0xff] %vm1098, %v1064
      %1102 = vst.msk [vmem:[%s334 + $0x18] sm:$0xff] %vm1098, %v1066
      %1103 = vst.msk [vmem:[%s334 + $0x20] sm:$0xff] %vm1098, %v1069
      %1104 = vst.msk [vmem:[%s334 + $0x28] sm:$0xff] %vm1098, %v1071
      %1105 = vst.msk [vmem:[%s334 + $0x30] sm:$0xff] %vm1098, %v1074
      %1106 = vst.msk [vmem:[%s334 + $0x38] sm:$0xff] %vm1098, %v1076
      %1107 = vst.msk [vmem:[%s334 + $0x40] sm:$0xff] %vm1098, %v1079
      %1108 = vst.msk [vmem:[%s334 + $0x48] sm:$0xff] %vm1098, %v1081
      %1109 = vst.msk [vmem:[%s334 + $0x50] sm:$0xff] %vm1098, %v1084
      %1110 = vst.msk [vmem:[%s334 + $0x58] sm:$0xff] %vm1098, %v1086
      %1111 = vst.msk [vmem:[%s334 + $0x60] sm:$0xff] %vm1098, %v1089
      %1112 = vst.msk [vmem:[%s334 + $0x68] sm:$0xff] %vm1098, %v1091
      %1113 = vst.msk [vmem:[%s334 + $0x70] sm:$0xff] %vm1098, %v1094
      %1114 = vst.msk [vmem:[%s334 + $0x78] sm:$0xff] %vm1098, %v1096
      %s1115 = smul.u32 16, %s20
      %p1116 = scmp.lt.s32.totalorder %s1115, 63
      %s1117 = scalar_select %p1116, %s1115, 63
      %s1118 = smul.addr %s1117, 8
      %s1119 = scalar_lea.vmem %s9, %s1118
      // Predicated region
      $region57: #{zone_prediction_forward.1} parent=55 // pred_check
        %p1120 = pneg %p232
      $region58: #{zone_prediction_forward.1} parent=55 // pred_check_branch
        %1122 = sbr.rel (%p1120) target = $region60
      $region59: #{zone_prediction_forward.1} parent=55 // pred_region
        %s1123 = smul.u32 16, %s20
      $region60: #{zone_prediction_forward.1} parent=55 // pred_fallthru
        _
    $region56: #{zone_prediction_forward.1} parent=5 // pred_fallthru
      _
    %p1124 = scmp.le.s32.totalorder 2, %s15
    // Predicated region
    $region61: #{zone_prediction_forward.1} parent=5 // pred_check
      %p1125 = pneg %p1124
    $region62: #{zone_prediction_forward.1} parent=5 // pred_check_branch
      %1127 = sbr.rel (%p1125) target = $region64
    $region63: #{zone_prediction_forward.1} parent=5 // pred_region
      %s1128 = ssub.s32 %s15, 2
      // Predicated region
      $region65: #{zone_prediction_forward.1} parent=63 // pred_check
        %p1129 = pneg %p238
      $region66: #{zone_prediction_forward.1} parent=63 // pred_check_branch
        %1131 = sbr.rel (%p1129) target = $region68
      $region67: #{zone_prediction_forward.1} parent=63 // pred_region
        %s1132 = smul.u32 16, %s21
        %p1133 = scmp.lt.s32.totalorder %s1132, 63
        %s1134 = scalar_select %p1133, %s1132, 63
        %s1135 = smul.addr %s1134, 8
        %s1136 = scalar_lea.vmem %s9, %s1135
      $region68: #{zone_prediction_forward.1} parent=63 // pred_fallthru
        _
    $region64: #{zone_prediction_forward.1} parent=5 // pred_fallthru
      _
  $region6: #{zone_prediction_forward.1} parent=0 // loop_footer
    %s19 = sadd.s32 1, %s15
  $region7: #{zone_prediction_forward.1} parent=0 // loop_footer_branch
    %14 = sbr.rel target = $region3
  $region8: #{zone_prediction_forward.1} parent=0 // loop_exit
    _

</llo_original>
